<compile_context>
chip_gen: v6e
topology: v6e:2x2x1
jax: 0.10.0
libtpu: 0.0.40
codegen_flags: <defaults>
</compile_context>

<pallas_src>
import jax
import jax.numpy as jnp
from jax.experimental import pallas as pl
from jax.experimental.pallas import tpu as pltpu


def _round_up(x, m):
    return ((x + m - 1) // m) * m


# ----------------------------------------------------------------------------
# Pallas kernel: fused 6-layer MLP (fc1..fc5 + ReLU, mean_head) for one batch tile
# ----------------------------------------------------------------------------
def _policy_kernel(x_ref,
                   w1_ref, b1_ref,
                   w2_ref, b2_ref,
                   w3_ref, b3_ref,
                   w4_ref, b4_ref,
                   w5_ref, b5_ref,
                   w6_ref, b6_ref,
                   mean_ref):
    def dense(h_f32, w_ref, b_ref):
        # bf16 operands feed the MXU natively; accumulate in f32.
        return jnp.dot(h_f32.astype(jnp.bfloat16), w_ref[...],
                       preferred_element_type=jnp.float32) + b_ref[...]

    h = x_ref[...]                                      # f32 activations
    h = jnp.maximum(dense(h, w1_ref, b1_ref), 0.0)      # fc1 + relu
    h = jnp.maximum(dense(h, w2_ref, b2_ref), 0.0)      # fc2 + relu
    h = jnp.maximum(dense(h, w3_ref, b3_ref), 0.0)      # fc3 + relu
    h = jnp.maximum(dense(h, w4_ref, b4_ref), 0.0)      # fc4 + relu
    h = jnp.maximum(dense(h, w5_ref, b5_ref), 0.0)      # fc5 + relu
    mean_ref[...] = dense(h, w6_ref, b6_ref).astype(mean_ref.dtype)   # mean_head


# ----------------------------------------------------------------------------
# One-time parameter preparation: pad, reshape biases to [1, N], cast weights
# to bf16, precompute std = exp(log_std).
# ----------------------------------------------------------------------------
def prepare_params(params, obs_dim, act_dim):
    (w1, b1), (w2, b2), (w3, b3), (w4, b4), (w5, b5), (w6, b6), log_std = params

    d0_pad = _round_up(max(obs_dim, 128), 128)
    a_pad = _round_up(max(act_dim, 128), 128)

    # Zero-padded rows/cols keep matmul semantics exact.
    w1_p = jnp.zeros((d0_pad, 128), jnp.float32).at[:obs_dim, :].set(w1)
    w6_p = jnp.zeros((128, a_pad), jnp.float32).at[:, :act_dim].set(w6)
    b6_p = jnp.zeros((1, a_pad), jnp.float32).at[:, :act_dim].set(b6[None, :])

    def layer(w, b):
        return (jnp.asarray(w, jnp.float32).astype(jnp.bfloat16),
                jnp.asarray(b, jnp.float32).reshape(1, -1))

    layers = (
        layer(w1_p, b1),
        layer(w2, b2),
        layer(w3, b3),
        layer(w4, b4),
        layer(w5, b5),
        (w6_p.astype(jnp.bfloat16), b6_p),
    )
    std = jnp.exp(jnp.asarray(log_std, jnp.float32))    # batch-independent
    return {"layers": layers, "std": std}


# ----------------------------------------------------------------------------
# Per-call forward: pad x, run the fused kernel over a batch grid, slice back.
# ----------------------------------------------------------------------------
@jax.jit
def policy_network_forward(x, prep):
    """x: [B, obs_dim] f32.  Returns (mean [B, act_dim], std [act_dim])."""
    layers = prep["layers"]
    std = prep["std"]
    act_dim = std.shape[0]

    (w1, _), *_rest = layers
    w6, _ = layers[-1]
    d0_pad = w1.shape[0]
    a_pad = w6.shape[1]

    B, obs_dim = x.shape

    # Batch tiling: one tile for small batches, 256-row tiles for rollouts.
    if B <= 256:
        b_pad = _round_up(max(B, 8), 8)
        tile_b = b_pad
    else:
        tile_b = 256
        b_pad = _round_up(B, tile_b)

    x_p = jnp.pad(x.astype(jnp.float32),
                  ((0, b_pad - B), (0, d0_pad - obs_dim)))

    def const_spec(arr):  # weights/biases: same block for every grid step
        return pl.BlockSpec(arr.shape, lambda i: (0, 0))

    in_specs = [pl.BlockSpec((tile_b, d0_pad), lambda i: (i, 0))]
    weight_args = []
    for w, b in layers:
        in_specs.append(const_spec(w))
        in_specs.append(const_spec(b))
        weight_args += [w, b]

    mean_p = pl.pallas_call(
        _policy_kernel,
        out_shape=jax.ShapeDtypeStruct((b_pad, a_pad), jnp.float32),
        grid=(b_pad // tile_b,),
        in_specs=in_specs,
        out_specs=pl.BlockSpec((tile_b, a_pad), lambda i: (i, 0)),
        compiler_params=pltpu.CompilerParams(
            dimension_semantics=("parallel",)),
    )(x_p, *weight_args)

    mean = mean_p[:B, :act_dim]
    return mean, std


# ----------------------------------------------------------------------------
# Deterministic parameter init (PyTorch nn.Linear-style uniform(-1/sqrt(fan_in)))
# ----------------------------------------------------------------------------
def init_params(key, obs_dim, act_dim):
    dims = [(obs_dim, 128), (128, 128), (128, 256), (256, 256), (256, 128),
            (128, act_dim)]
    params = []
    for fan_in, fan_out in dims:
        key, kw, kb = jax.random.split(key, 3)
        bound = 1.0 / jnp.sqrt(fan_in)
        w = jax.random.uniform(kw, (fan_in, fan_out), jnp.float32, -bound, bound)
        b = jax.random.uniform(kb, (fan_out,), jnp.float32, -bound, bound)
        params.append((w, b))
    log_std = jnp.zeros((act_dim,), jnp.float32)
    return tuple(params) + (log_std,)


# ----------------------------------------------------------------------------
# References for sanity checks
# ----------------------------------------------------------------------------
def _ref_forward_f32(x, params):
    (w1, b1), (w2, b2), (w3, b3), (w4, b4), (w5, b5), (w6, b6), log_std = params
    h = x
    for w, b in [(w1, b1), (w2, b2), (w3, b3), (w4, b4), (w5, b5)]:
        h = jnp.maximum(h @ w + b, 0.0)
    return h @ w6 + b6, jnp.exp(log_std)


def _ref_forward_bf16(x, params):
    """Matched precision: bf16 matmul operands, f32 accumulation / elementwise."""
    (w1, b1), (w2, b2), (w3, b3), (w4, b4), (w5, b5), (w6, b6), log_std = params

    def dense(h, w, b):
        return jnp.dot(h.astype(jnp.bfloat16), w.astype(jnp.bfloat16),
                       preferred_element_type=jnp.float32) + b

    h = x
    for w, b in [(w1, b1), (w2, b2), (w3, b3), (w4, b4), (w5, b5)]:
        h = jnp.maximum(dense(h, w, b), 0.0)
    return dense(h, w6, b6), jnp.exp(log_std)


if __name__ == "__main__":
    # Acrobot-style dims (kept small): obs_dim=6, act_dim=1, batch=2.
    obs_dim, act_dim, batch = 6, 1, 2

    key = jax.random.PRNGKey(0)
    key, kx = jax.random.split(key)
    params = init_params(key, obs_dim, act_dim)
    x = jax.random.normal(kx, (batch, obs_dim), jnp.float32)

    prep = prepare_params(params, obs_dim, act_dim)     # one-time padding/cast

    mean, std = policy_network_forward(x, prep)
    mean, std = jax.block_until_ready((mean, std))

    assert mean.shape == (batch, act_dim) and std.shape == (act_dim,)

    # Tight check vs. a precision-matched (bf16-operand) reference.
    mean_ref_bf16, std_ref = _ref_forward_bf16(x, params)
    assert jnp.allclose(mean, mean_ref_bf16, atol=1e-4, rtol=1e-4)
    assert jnp.allclose(std, std_ref, atol=1e-6, rtol=1e-6)

    # Looser semantic check vs. pure-f32 reference (bf16 matmul rounding).
    mean_ref_f32, _ = _ref_forward_f32(x, params)
    assert jnp.allclose(mean, mean_ref_f32, atol=5e-2, rtol=5e-2)

    print("KERNEL_OK")
</pallas_src>

<mosaic_0001>
module attributes {stable_mosaic.version = 11 : i64} {
  func.func @_policy_kernel(%arg0: i32, %arg1: memref<8x128xf32, #tpu.memory_space<vmem>>, %arg2: memref<128x128xbf16, #tpu.memory_space<vmem>>, %arg3: memref<1x128xf32, #tpu.memory_space<vmem>>, %arg4: memref<128x128xbf16, #tpu.memory_space<vmem>>, %arg5: memref<1x128xf32, #tpu.memory_space<vmem>>, %arg6: memref<128x256xbf16, #tpu.memory_space<vmem>>, %arg7: memref<1x256xf32, #tpu.memory_space<vmem>>, %arg8: memref<256x256xbf16, #tpu.memory_space<vmem>>, %arg9: memref<1x256xf32, #tpu.memory_space<vmem>>, %arg10: memref<256x128xbf16, #tpu.memory_space<vmem>>, %arg11: memref<1x128xf32, #tpu.memory_space<vmem>>, %arg12: memref<128x128xbf16, #tpu.memory_space<vmem>>, %arg13: memref<1x128xf32, #tpu.memory_space<vmem>>, %arg14: memref<8x128xf32, #tpu.memory_space<vmem>>) attributes {dimension_semantics = [#tpu.dimension_semantics<parallel>], iteration_bounds = array<i64: 1>, scalar_prefetch = 0 : i64, scratch_operands = 0 : i64, tpu.core_type = #tpu.core_type<tc>, window_params = [{transform_indices = @transform_0, window_bounds = array<i64: 8, 128>}, {pipeline_mode = #tpu.pipeline_mode<synchronous>, transform_indices = @transform_1, window_bounds = array<i64: 128, 128>}, {pipeline_mode = #tpu.pipeline_mode<synchronous>, transform_indices = @transform_2, window_bounds = array<i64: 1, 128>}, {pipeline_mode = #tpu.pipeline_mode<synchronous>, transform_indices = @transform_3, window_bounds = array<i64: 128, 128>}, {pipeline_mode = #tpu.pipeline_mode<synchronous>, transform_indices = @transform_4, window_bounds = array<i64: 1, 128>}, {pipeline_mode = #tpu.pipeline_mode<synchronous>, transform_indices = @transform_5, window_bounds = array<i64: 128, 256>}, {pipeline_mode = #tpu.pipeline_mode<synchronous>, transform_indices = @transform_6, window_bounds = array<i64: 1, 256>}, {pipeline_mode = #tpu.pipeline_mode<synchronous>, transform_indices = @transform_7, window_bounds = array<i64: 256, 256>}, {pipeline_mode = #tpu.pipeline_mode<synchronous>, transform_indices = @transform_8, window_bounds = array<i64: 1, 256>}, {pipeline_mode = #tpu.pipeline_mode<synchronous>, transform_indices = @transform_9, window_bounds = array<i64: 256, 128>}, {pipeline_mode = #tpu.pipeline_mode<synchronous>, transform_indices = @transform_10, window_bounds = array<i64: 1, 128>}, {pipeline_mode = #tpu.pipeline_mode<synchronous>, transform_indices = @transform_11, window_bounds = array<i64: 128, 128>}, {pipeline_mode = #tpu.pipeline_mode<synchronous>, transform_indices = @transform_12, window_bounds = array<i64: 1, 128>}, {transform_indices = @transform_13, window_bounds = array<i64: 8, 128>}]} {
    %c0 = arith.constant 0 : index
    %c0_0 = arith.constant 0 : index
    %0 = vector.load %arg1[%c0, %c0_0] : memref<8x128xf32, #tpu.memory_space<vmem>>, vector<8x128xf32>
    %1 = arith.truncf %0 : vector<8x128xf32> to vector<8x128xbf16>
    %c0_1 = arith.constant 0 : index
    %c0_2 = arith.constant 0 : index
    %2 = vector.load %arg2[%c0_1, %c0_2] : memref<128x128xbf16, #tpu.memory_space<vmem>>, vector<128x128xbf16>
    %cst = arith.constant dense<0.000000e+00> : vector<8x128xf32>
    %3 = tpu.matmul %1, %2, %cst {dimension_numbers = #tpu.dot_dimension_numbers<[1], [0], [0], [1], [0, 0, 1, 1], [], []>} : vector<8x128xbf16>, vector<128x128xbf16>, vector<8x128xf32> -> vector<8x128xf32>
    %c0_3 = arith.constant 0 : index
    %c0_4 = arith.constant 0 : index
    %4 = vector.load %arg3[%c0_3, %c0_4] : memref<1x128xf32, #tpu.memory_space<vmem>>, vector<1x128xf32>
    %5 = vector.broadcast %4 : vector<1x128xf32> to vector<8x128xf32>
    %6 = arith.addf %3, %5 : vector<8x128xf32>
    %cst_5 = arith.constant 0.000000e+00 : f32
    %7 = vector.broadcast %cst_5 : f32 to vector<8x128xf32>
    %8 = arith.maximumf %6, %7 : vector<8x128xf32>
    %9 = arith.truncf %8 : vector<8x128xf32> to vector<8x128xbf16>
    %c0_6 = arith.constant 0 : index
    %c0_7 = arith.constant 0 : index
    %10 = vector.load %arg4[%c0_6, %c0_7] : memref<128x128xbf16, #tpu.memory_space<vmem>>, vector<128x128xbf16>
    %cst_8 = arith.constant dense<0.000000e+00> : vector<8x128xf32>
    %11 = tpu.matmul %9, %10, %cst_8 {dimension_numbers = #tpu.dot_dimension_numbers<[1], [0], [0], [1], [0, 0, 1, 1], [], []>} : vector<8x128xbf16>, vector<128x128xbf16>, vector<8x128xf32> -> vector<8x128xf32>
    %c0_9 = arith.constant 0 : index
    %c0_10 = arith.constant 0 : index
    %12 = vector.load %arg5[%c0_9, %c0_10] : memref<1x128xf32, #tpu.memory_space<vmem>>, vector<1x128xf32>
    %13 = vector.broadcast %12 : vector<1x128xf32> to vector<8x128xf32>
    %14 = arith.addf %11, %13 : vector<8x128xf32>
    %cst_11 = arith.constant 0.000000e+00 : f32
    %15 = vector.broadcast %cst_11 : f32 to vector<8x128xf32>
    %16 = arith.maximumf %14, %15 : vector<8x128xf32>
    %17 = arith.truncf %16 : vector<8x128xf32> to vector<8x128xbf16>
    %c0_12 = arith.constant 0 : index
    %c0_13 = arith.constant 0 : index
    %18 = vector.load %arg6[%c0_12, %c0_13] : memref<128x256xbf16, #tpu.memory_space<vmem>>, vector<128x256xbf16>
    %cst_14 = arith.constant dense<0.000000e+00> : vector<8x256xf32>
    %19 = tpu.matmul %17, %18, %cst_14 {dimension_numbers = #tpu.dot_dimension_numbers<[1], [0], [0], [1], [0, 0, 1, 1], [], []>} : vector<8x128xbf16>, vector<128x256xbf16>, vector<8x256xf32> -> vector<8x256xf32>
    %c0_15 = arith.constant 0 : index
    %c0_16 = arith.constant 0 : index
    %20 = vector.load %arg7[%c0_15, %c0_16] : memref<1x256xf32, #tpu.memory_space<vmem>>, vector<1x256xf32>
    %21 = vector.broadcast %20 : vector<1x256xf32> to vector<8x256xf32>
    %22 = arith.addf %19, %21 : vector<8x256xf32>
    %cst_17 = arith.constant 0.000000e+00 : f32
    %23 = vector.broadcast %cst_17 : f32 to vector<8x256xf32>
    %24 = arith.maximumf %22, %23 : vector<8x256xf32>
    %25 = arith.truncf %24 : vector<8x256xf32> to vector<8x256xbf16>
    %c0_18 = arith.constant 0 : index
    %c0_19 = arith.constant 0 : index
    %26 = vector.load %arg8[%c0_18, %c0_19] : memref<256x256xbf16, #tpu.memory_space<vmem>>, vector<256x256xbf16>
    %cst_20 = arith.constant dense<0.000000e+00> : vector<8x256xf32>
    %27 = tpu.matmul %25, %26, %cst_20 {dimension_numbers = #tpu.dot_dimension_numbers<[1], [0], [0], [1], [0, 0, 1, 1], [], []>} : vector<8x256xbf16>, vector<256x256xbf16>, vector<8x256xf32> -> vector<8x256xf32>
    %c0_21 = arith.constant 0 : index
    %c0_22 = arith.constant 0 : index
    %28 = vector.load %arg9[%c0_21, %c0_22] : memref<1x256xf32, #tpu.memory_space<vmem>>, vector<1x256xf32>
    %29 = vector.broadcast %28 : vector<1x256xf32> to vector<8x256xf32>
    %30 = arith.addf %27, %29 : vector<8x256xf32>
    %cst_23 = arith.constant 0.000000e+00 : f32
    %31 = vector.broadcast %cst_23 : f32 to vector<8x256xf32>
    %32 = arith.maximumf %30, %31 : vector<8x256xf32>
    %33 = arith.truncf %32 : vector<8x256xf32> to vector<8x256xbf16>
    %c0_24 = arith.constant 0 : index
    %c0_25 = arith.constant 0 : index
    %34 = vector.load %arg10[%c0_24, %c0_25] : memref<256x128xbf16, #tpu.memory_space<vmem>>, vector<256x128xbf16>
    %cst_26 = arith.constant dense<0.000000e+00> : vector<8x128xf32>
    %35 = tpu.matmul %33, %34, %cst_26 {dimension_numbers = #tpu.dot_dimension_numbers<[1], [0], [0], [1], [0, 0, 1, 1], [], []>} : vector<8x256xbf16>, vector<256x128xbf16>, vector<8x128xf32> -> vector<8x128xf32>
    %c0_27 = arith.constant 0 : index
    %c0_28 = arith.constant 0 : index
    %36 = vector.load %arg11[%c0_27, %c0_28] : memref<1x128xf32, #tpu.memory_space<vmem>>, vector<1x128xf32>
    %37 = vector.broadcast %36 : vector<1x128xf32> to vector<8x128xf32>
    %38 = arith.addf %35, %37 : vector<8x128xf32>
    %cst_29 = arith.constant 0.000000e+00 : f32
    %39 = vector.broadcast %cst_29 : f32 to vector<8x128xf32>
    %40 = arith.maximumf %38, %39 : vector<8x128xf32>
    %41 = arith.truncf %40 : vector<8x128xf32> to vector<8x128xbf16>
    %c0_30 = arith.constant 0 : index
    %c0_31 = arith.constant 0 : index
    %42 = vector.load %arg12[%c0_30, %c0_31] : memref<128x128xbf16, #tpu.memory_space<vmem>>, vector<128x128xbf16>
    %cst_32 = arith.constant dense<0.000000e+00> : vector<8x128xf32>
    %43 = tpu.matmul %41, %42, %cst_32 {dimension_numbers = #tpu.dot_dimension_numbers<[1], [0], [0], [1], [0, 0, 1, 1], [], []>} : vector<8x128xbf16>, vector<128x128xbf16>, vector<8x128xf32> -> vector<8x128xf32>
    %c0_33 = arith.constant 0 : index
    %c0_34 = arith.constant 0 : index
    %44 = vector.load %arg13[%c0_33, %c0_34] : memref<1x128xf32, #tpu.memory_space<vmem>>, vector<1x128xf32>
    %45 = vector.broadcast %44 : vector<1x128xf32> to vector<8x128xf32>
    %46 = arith.addf %43, %45 : vector<8x128xf32>
    %c0_35 = arith.constant 0 : index
    %c0_36 = arith.constant 0 : index
    %47 = vector.load %arg14[%c0_35, %c0_36] : memref<8x128xf32, #tpu.memory_space<vmem>>, vector<8x128xf32>
    tpu.vector_store %arg14[%c0_35, %c0_36], %46 {strides = array<i32>} : memref<8x128xf32, #tpu.memory_space<vmem>>, vector<8x128xf32>,
    return
  }
  func.func @transform_0(%arg0: i32) -> (i32, i32) {
    %c0_i32 = arith.constant 0 : i32
    %c0_i32_0 = arith.constant 0 : i32
    return %arg0, %c0_i32 : i32, i32
  }
  func.func @transform_1(%arg0: i32) -> (i32, i32) {
    %c0_i32 = arith.constant 0 : i32
    %c0_i32_0 = arith.constant 0 : i32
    %c0_i32_1 = arith.constant 0 : i32
    return %c0_i32, %c0_i32_0 : i32, i32
  }
  func.func @transform_2(%arg0: i32) -> (i32, i32) {
    %c0_i32 = arith.constant 0 : i32
    %c0_i32_0 = arith.constant 0 : i32
    %c0_i32_1 = arith.constant 0 : i32
    return %c0_i32, %c0_i32_0 : i32, i32
  }
  func.func @transform_3(%arg0: i32) -> (i32, i32) {
    %c0_i32 = arith.constant 0 : i32
    %c0_i32_0 = arith.constant 0 : i32
    %c0_i32_1 = arith.constant 0 : i32
    return %c0_i32, %c0_i32_0 : i32, i32
  }
  func.func @transform_4(%arg0: i32) -> (i32, i32) {
    %c0_i32 = arith.constant 0 : i32
    %c0_i32_0 = arith.constant 0 : i32
    %c0_i32_1 = arith.constant 0 : i32
    return %c0_i32, %c0_i32_0 : i32, i32
  }
  func.func @transform_5(%arg0: i32) -> (i32, i32) {
    %c0_i32 = arith.constant 0 : i32
    %c0_i32_0 = arith.constant 0 : i32
    %c0_i32_1 = arith.constant 0 : i32
    return %c0_i32, %c0_i32_0 : i32, i32
  }
  func.func @transform_6(%arg0: i32) -> (i32, i32) {
    %c0_i32 = arith.constant 0 : i32
    %c0_i32_0 = arith.constant 0 : i32
    %c0_i32_1 = arith.constant 0 : i32
    return %c0_i32, %c0_i32_0 : i32, i32
  }
  func.func @transform_7(%arg0: i32) -> (i32, i32) {
    %c0_i32 = arith.constant 0 : i32
    %c0_i32_0 = arith.constant 0 : i32
    %c0_i32_1 = arith.constant 0 : i32
    return %c0_i32, %c0_i32_0 : i32, i32
  }
  func.func @transform_8(%arg0: i32) -> (i32, i32) {
    %c0_i32 = arith.constant 0 : i32
    %c0_i32_0 = arith.constant 0 : i32
    %c0_i32_1 = arith.constant 0 : i32
    return %c0_i32, %c0_i32_0 : i32, i32
  }
  func.func @transform_9(%arg0: i32) -> (i32, i32) {
    %c0_i32 = arith.constant 0 : i32
    %c0_i32_0 = arith.constant 0 : i32
    %c0_i32_1 = arith.constant 0 : i32
    return %c0_i32, %c0_i32_0 : i32, i32
  }
  func.func @transform_10(%arg0: i32) -> (i32, i32) {
    %c0_i32 = arith.constant 0 : i32
    %c0_i32_0 = arith.constant 0 : i32
    %c0_i32_1 = arith.constant 0 : i32
    return %c0_i32, %c0_i32_0 : i32, i32
  }
  func.func @transform_11(%arg0: i32) -> (i32, i32) {
    %c0_i32 = arith.constant 0 : i32
    %c0_i32_0 = arith.constant 0 : i32
    %c0_i32_1 = arith.constant 0 : i32
    return %c0_i32, %c0_i32_0 : i32, i32
  }
  func.func @transform_12(%arg0: i32) -> (i32, i32) {
    %c0_i32 = arith.constant 0 : i32
    %c0_i32_0 = arith.constant 0 : i32
    %c0_i32_1 = arith.constant 0 : i32
    return %c0_i32, %c0_i32_0 : i32, i32
  }
  func.func @transform_13(%arg0: i32) -> (i32, i32) {
    %c0_i32 = arith.constant 0 : i32
    %c0_i32_0 = arith.constant 0 : i32
    return %arg0, %c0_i32 : i32, i32
  }
}

</mosaic_0001>

<llo_original>
// kernel: policy_network_forward.1
$region0: #{policy_network_forward.1}
  #allocation0 [shape = 'u32[]', space=smem, size = 0x4, offset = 0x4, fixed_abs, tag = 'smem constant byte address 0x4 - core index']
  #allocation1 [shape = 'u32[144,128]{1,0:T(1,128)}', space=vmem, size = 0x12000, scoped, tag = 'internal scratch']
  %s0 = inlined_call_operand.vmem [shape: f32[8,128], index: 0, kind: input, shape index: {}]
  %s1 = inlined_call_operand.hbm [shape: bf16[128,128], index: 1, kind: input, shape index: {}]
  %s2 = inlined_call_operand.vmem [shape: f32[1,128], index: 2, kind: input, shape index: {}]
  %s3 = inlined_call_operand.hbm [shape: bf16[128,128], index: 3, kind: input, shape index: {}]
  %s4 = inlined_call_operand.vmem [shape: f32[1,128], index: 4, kind: input, shape index: {}]
  %s5 = inlined_call_operand.hbm [shape: bf16[128,256], index: 5, kind: input, shape index: {}]
  %s6 = inlined_call_operand.vmem [shape: f32[1,256], index: 6, kind: input, shape index: {}]
  %s7 = inlined_call_operand.hbm [shape: bf16[256,256], index: 7, kind: input, shape index: {}]
  %s8 = inlined_call_operand.vmem [shape: f32[1,256], index: 8, kind: input, shape index: {}]
  %s9 = inlined_call_operand.hbm [shape: bf16[256,128], index: 9, kind: input, shape index: {}]
  %s10 = inlined_call_operand.vmem [shape: f32[1,128], index: 10, kind: input, shape index: {}]
  %s11 = inlined_call_operand.hbm [shape: bf16[128,128], index: 11, kind: input, shape index: {}]
  %s12 = inlined_call_operand.vmem [shape: f32[1,128], index: 12, kind: input, shape index: {}]
  %s13 = inlined_call_operand.vmem [shape: f32[8,128], index: 13, kind: output, shape index: {}]
  %s14 = sld [smem:[#allocation0]]
  $region86: #{policy_network_forward.1} parent=0
    _
  %s16 = ssub.s32 1, %s14
  %s17 = scalar_select 0, %s16, %s14
  $region1: #{policy_network_forward.1} parent=0
    #allocation2 [shape = 'u8[32768]{0}', space=vmem, size = 0x8000, scoped, tag = 'input window, operand 1, single buffered']
    #allocation3 [shape = 's32[1]{0}', space=sflag, size = 0x4, scoped, tag = 'scoped memory for policy_network_forward.1']
    #allocation4 [shape = 'u8[32768]{0}', space=vmem, size = 0x8000, scoped, tag = 'input window, operand 3, single buffered']
    #allocation5 [shape = 's32[1]{0}', space=sflag, size = 0x4, scoped, tag = 'scoped memory for policy_network_forward.1']
    #allocation6 [shape = 'u8[65536]{0}', space=vmem, size = 0x10000, scoped, tag = 'input window, operand 5, single buffered']
    #allocation7 [shape = 'u8[131072]{0}', space=vmem, size = 0x20000, scoped, tag = 'input window, operand 7, single buffered']
    #allocation8 [shape = 's32[1]{0}', space=sflag, size = 0x4, scoped, tag = 'scoped memory for policy_network_forward.1']
    #allocation9 [shape = 'u8[65536]{0}', space=vmem, size = 0x10000, scoped, tag = 'input window, operand 9, single buffered']
    #allocation10 [shape = 'u8[32768]{0}', space=vmem, size = 0x8000, scoped, tag = 'input window, operand 11, single buffered']
    #allocation11 [shape = 's32[1]{0}', space=sflag, size = 0x4, scoped, tag = 'scoped memory for policy_network_forward.1']
    %18 = vsyncpa [#allocation3], 0
    %19 = vsyncpa [#allocation5], 0
    %20 = vsyncpa [#allocation8], 0
    %21 = vsyncpa [#allocation11], 0
    // Predicated region
    $region2: #{policy_network_forward.1} parent=1 // pred_check
      _
    $region3: #{policy_network_forward.1} parent=1 // pred_check_branch
      %23 = sbr.rel (0) target = $region5
    $region4: #{policy_network_forward.1} parent=1 // pred_region
      _
    $region5: #{policy_network_forward.1} parent=1 // pred_fallthru
      _
    // Predicated region
    $region6: #{policy_network_forward.1} parent=1 // pred_check
      _
    $region7: #{policy_network_forward.1} parent=1 // pred_check_branch
      %25 = sbr.rel (0) target = $region9
    $region8: #{policy_network_forward.1} parent=1 // pred_region
      %s27 = ssub.s32 1024, 1024
      %28 = vsyncadd [#allocation3], %s27
      %s29 = sshll.u32 [#allocation2], 4
      %s30 = int_to_ptr.vmem [resolvable:$true] %s29
      %35 = dma.hbm_to_vmem [thread:$0]  %s1, 1024, %s30, [#allocation3], 64, 64, 4
    $region9: #{policy_network_forward.1} parent=1 // pred_fallthru
      _
    // Predicated region
    $region10: #{policy_network_forward.1} parent=1 // pred_check
      _
    $region11: #{policy_network_forward.1} parent=1 // pred_check_branch
      %37 = sbr.rel (0) target = $region13
    $region12: #{policy_network_forward.1} parent=1 // pred_region
      _
    $region13: #{policy_network_forward.1} parent=1 // pred_fallthru
      _
    // Predicated region
    $region14: #{policy_network_forward.1} parent=1 // pred_check
      _
    $region15: #{policy_network_forward.1} parent=1 // pred_check_branch
      %39 = sbr.rel (0) target = $region17
    $region16: #{policy_network_forward.1} parent=1 // pred_region
      %s41 = ssub.s32 1024, 1024
      %42 = vsyncadd [#allocation5], %s41
      %s43 = sshll.u32 [#allocation4], 4
      %s44 = int_to_ptr.vmem [resolvable:$true] %s43
      %49 = dma.hbm_to_vmem [thread:$0]  %s3, 1024, %s44, [#allocation5], 64, 64, 4
    $region17: #{policy_network_forward.1} parent=1 // pred_fallthru
      _
    // Predicated region
    $region18: #{policy_network_forward.1} parent=1 // pred_check
      _
    $region19: #{policy_network_forward.1} parent=1 // pred_check_branch
      %51 = sbr.rel (0) target = $region21
    $region20: #{policy_network_forward.1} parent=1 // pred_region
      _
    $region21: #{policy_network_forward.1} parent=1 // pred_fallthru
      _
    // Predicated region
    $region22: #{policy_network_forward.1} parent=1 // pred_check
      _
    $region23: #{policy_network_forward.1} parent=1 // pred_check_branch
      %53 = sbr.rel (0) target = $region25
    $region24: #{policy_network_forward.1} parent=1 // pred_region
      %s55 = ssub.s32 2048, 2048
      %56 = vsyncadd [#allocation5], %s55
      %s57 = sshll.u32 [#allocation6], 4
      %s58 = int_to_ptr.vmem [resolvable:$true] %s57
      %63 = dma.hbm_to_vmem [thread:$0]  %s5, 2048, %s58, [#allocation5], 128, 128, 8
    $region25: #{policy_network_forward.1} parent=1 // pred_fallthru
      _
    // Predicated region
    $region26: #{policy_network_forward.1} parent=1 // pred_check
      _
    $region27: #{policy_network_forward.1} parent=1 // pred_check_branch
      %65 = sbr.rel (0) target = $region29
    $region28: #{policy_network_forward.1} parent=1 // pred_region
      _
    $region29: #{policy_network_forward.1} parent=1 // pred_fallthru
      _
    // Predicated region
    $region30: #{policy_network_forward.1} parent=1 // pred_check
      _
    $region31: #{policy_network_forward.1} parent=1 // pred_check_branch
      %67 = sbr.rel (0) target = $region33
    $region32: #{policy_network_forward.1} parent=1 // pred_region
      %s69 = ssub.s32 4096, 4096
      %70 = vsyncadd [#allocation8], %s69
      %s71 = sshll.u32 [#allocation7], 4
      %s72 = int_to_ptr.vmem [resolvable:$true] %s71
      %77 = dma.hbm_to_vmem [thread:$0]  %s7, 4096, %s72, [#allocation8], 128, 128, 8
    $region33: #{policy_network_forward.1} parent=1 // pred_fallthru
      _
    // Predicated region
    $region34: #{policy_network_forward.1} parent=1 // pred_check
      _
    $region35: #{policy_network_forward.1} parent=1 // pred_check_branch
      %79 = sbr.rel (0) target = $region37
    $region36: #{policy_network_forward.1} parent=1 // pred_region
      _
    $region37: #{policy_network_forward.1} parent=1 // pred_fallthru
      _
    // Predicated region
    $region38: #{policy_network_forward.1} parent=1 // pred_check
      _
    $region39: #{policy_network_forward.1} parent=1 // pred_check_branch
      %81 = sbr.rel (0) target = $region41
    $region40: #{policy_network_forward.1} parent=1 // pred_region
      %s83 = ssub.s32 2048, 2048
      %84 = vsyncadd [#allocation8], %s83
      %s85 = sshll.u32 [#allocation9], 4
      %s86 = int_to_ptr.vmem [resolvable:$true] %s85
      %91 = dma.hbm_to_vmem [thread:$0]  %s9, 2048, %s86, [#allocation8], 64, 64, 4
    $region41: #{policy_network_forward.1} parent=1 // pred_fallthru
      _
    // Predicated region
    $region42: #{policy_network_forward.1} parent=1 // pred_check
      _
    $region43: #{policy_network_forward.1} parent=1 // pred_check_branch
      %93 = sbr.rel (0) target = $region45
    $region44: #{policy_network_forward.1} parent=1 // pred_region
      _
    $region45: #{policy_network_forward.1} parent=1 // pred_fallthru
      _
    // Predicated region
    $region46: #{policy_network_forward.1} parent=1 // pred_check
      _
    $region47: #{policy_network_forward.1} parent=1 // pred_check_branch
      %95 = sbr.rel (0) target = $region49
    $region48: #{policy_network_forward.1} parent=1 // pred_region
      %s97 = ssub.s32 1024, 1024
      %98 = vsyncadd [#allocation11], %s97
      %s99 = sshll.u32 [#allocation10], 4
      %s100 = int_to_ptr.vmem [resolvable:$true] %s99
      %105 = dma.hbm_to_vmem [thread:$0]  %s11, 1024, %s100, [#allocation11], 64, 64, 4
    $region49: #{policy_network_forward.1} parent=1 // pred_fallthru
      _
    // Predicated region
    $region50: #{policy_network_forward.1} parent=1 // pred_check
      _
    $region51: #{policy_network_forward.1} parent=1 // pred_check_branch
      %107 = sbr.rel (0) target = $region53
    $region52: #{policy_network_forward.1} parent=1 // pred_region
      _
    $region53: #{policy_network_forward.1} parent=1 // pred_fallthru
      _
    // Predicated region
    $region54: #{policy_network_forward.1} parent=1 // pred_check
      _
    $region55: #{policy_network_forward.1} parent=1 // pred_check_branch
      %109 = sbr.rel (0) target = $region57
    $region56: #{policy_network_forward.1} parent=1 // pred_region
      %110 = dma.done [#allocation3], 1024
    $region57: #{policy_network_forward.1} parent=1 // pred_fallthru
      _
    // Predicated region
    $region58: #{policy_network_forward.1} parent=1 // pred_check
      _
    $region59: #{policy_network_forward.1} parent=1 // pred_check_branch
      %112 = sbr.rel (0) target = $region61
    $region60: #{policy_network_forward.1} parent=1 // pred_region
      %113 = dma.done [#allocation5], 1024
    $region61: #{policy_network_forward.1} parent=1 // pred_fallthru
      _
    // Predicated region
    $region62: #{policy_network_forward.1} parent=1 // pred_check
      _
    $region63: #{policy_network_forward.1} parent=1 // pred_check_branch
      %115 = sbr.rel (0) target = $region65
    $region64: #{policy_network_forward.1} parent=1 // pred_region
      %116 = dma.done [#allocation5], 2048
    $region65: #{policy_network_forward.1} parent=1 // pred_fallthru
      _
    // Predicated region
    $region66: #{policy_network_forward.1} parent=1 // pred_check
      _
    $region67: #{policy_network_forward.1} parent=1 // pred_check_branch
      %118 = sbr.rel (0) target = $region69
    $region68: #{policy_network_forward.1} parent=1 // pred_region
      %119 = dma.done [#allocation8], 4096
    $region69: #{policy_network_forward.1} parent=1 // pred_fallthru
      _
    // Predicated region
    $region70: #{policy_network_forward.1} parent=1 // pred_check
      _
    $region71: #{policy_network_forward.1} parent=1 // pred_check_branch
      %121 = sbr.rel (0) target = $region73
    $region72: #{policy_network_forward.1} parent=1 // pred_region
      %122 = dma.done [#allocation8], 2048
    $region73: #{policy_network_forward.1} parent=1 // pred_fallthru
      _
    // Predicated region
    $region74: #{policy_network_forward.1} parent=1 // pred_check
      _
    $region75: #{policy_network_forward.1} parent=1 // pred_check_branch
      %124 = sbr.rel (0) target = $region77
    $region76: #{policy_network_forward.1} parent=1 // pred_region
      %125 = dma.done [#allocation11], 1024
    $region77: #{policy_network_forward.1} parent=1 // pred_fallthru
      _
    %v127 = vld [vmem:[%s0] sm:$0xff]
    %v128 = vpack.c.bf16 %v127, %v127
    %v129 = vld [vmem:[#allocation2] sm:$0xf]
    %v130 = vld [vmem:[#allocation2 + $0x4] sm:$0xf]
    %v131 = vld [vmem:[#allocation2 + $0x8] sm:$0xf]
    %v132 = vld [vmem:[#allocation2 + $0xc] sm:$0xf]
    %v133 = vld [vmem:[#allocation2 + $0x10] sm:$0xf]
    %v134 = vld [vmem:[#allocation2 + $0x14] sm:$0xf]
    %v135 = vld [vmem:[#allocation2 + $0x18] sm:$0xf]
    %v136 = vld [vmem:[#allocation2 + $0x1c] sm:$0xf]
    %v137 = vld [vmem:[#allocation2 + $0x20] sm:$0xf]
    %v138 = vld [vmem:[#allocation2 + $0x24] sm:$0xf]
    %v139 = vld [vmem:[#allocation2 + $0x28] sm:$0xf]
    %v140 = vld [vmem:[#allocation2 + $0x2c] sm:$0xf]
    %v141 = vld [vmem:[#allocation2 + $0x30] sm:$0xf]
    %v142 = vld [vmem:[#allocation2 + $0x34] sm:$0xf]
    %v143 = vld [vmem:[#allocation2 + $0x38] sm:$0xf]
    %v144 = vld [vmem:[#allocation2 + $0x3c] sm:$0xf]
    %v145 = vld [vmem:[%s2] sm:$0x1]
    %v147 = vlaneseq
    %v148 = vshrl.u32 %v147, 7
    %v149 = vsub.s32 0, %v148
    %v150 = vrot.slane %v145, %v149
    %v168 = vunpack.c.l.b16 %v129
    %v169 = vunpack.c.l.b16 %v130
    %v170 = vunpack.c.l.b16 %v131
    %v171 = vunpack.c.l.b16 %v132
    %v172 = vunpack.c.l.b16 %v133
    %v173 = vunpack.c.l.b16 %v134
    %v174 = vunpack.c.l.b16 %v135
    %v175 = vunpack.c.l.b16 %v136
    %v176 = vunpack.c.l.b16 %v137
    %v177 = vunpack.c.l.b16 %v138
    %v178 = vunpack.c.l.b16 %v139
    %v179 = vunpack.c.l.b16 %v140
    %v180 = vunpack.c.l.b16 %v141
    %v181 = vunpack.c.l.b16 %v142
    %v182 = vunpack.c.l.b16 %v143
    %v183 = vunpack.c.l.b16 %v144
    %v184 = vpack.c.b16 %v169, %v168
    %v185 = vpack.c.b16 %v171, %v170
    %v186 = vpack.c.b16 %v173, %v172
    %v187 = vpack.c.b16 %v175, %v174
    %v188 = vpack.c.b16 %v177, %v176
    %v189 = vpack.c.b16 %v179, %v178
    %v190 = vpack.c.b16 %v181, %v180
    %v191 = vpack.c.b16 %v183, %v182
    %200 = vmatprep.subr.bf16.mxu0 0
    %201 = vmatpush1.bf16.msra.mxu0 %v191
    %202 = vmatprep.subr.bf16.mxu0 0
    %203 = vmatpush1.bf16.msra.mxu0 %v190
    %204 = vmatprep.subr.bf16.mxu0 0
    %205 = vmatpush1.bf16.msra.mxu0 %v189
    %206 = vmatprep.subr.bf16.mxu0 0
    %207 = vmatpush1.bf16.msra.mxu0 %v188
    %208 = vmatprep.subr.bf16.mxu0 0
    %209 = vmatpush1.bf16.msra.mxu0 %v187
    %210 = vmatprep.subr.bf16.mxu0 0
    %211 = vmatpush1.bf16.msra.mxu0 %v186
    %212 = vmatprep.subr.bf16.mxu0 0
    %213 = vmatpush1.bf16.msra.mxu0 %v185
    %214 = vmatprep.subr.bf16.mxu0 0
    %215 = vmatpush1.bf16.msra.mxu0 %v184
    %216 = vmatprep.subr.bf16.mxu0 0
    %217 = vmatpush2.bf16.msra.mxu0 0
    %218 = vmatprep.subr.bf16.mxu0 0
    %219 = vmatpush2.bf16.msra.mxu0 0
    %220 = vmatprep.subr.bf16.mxu0 0
    %221 = vmatpush2.bf16.msra.mxu0 0
    %222 = vmatprep.subr.bf16.mxu0 0
    %223 = vmatpush2.bf16.msra.mxu0 0
    %224 = vmatprep.subr.bf16.mxu0 0
    %225 = vmatpush2.bf16.msra.mxu0 0
    %226 = vmatprep.subr.bf16.mxu0 0
    %227 = vmatpush2.bf16.msra.mxu0 0
    %228 = vmatprep.subr.bf16.mxu0 0
    %229 = vmatpush2.bf16.msra.mxu0 0
    %230 = vmatprep.subr.bf16.mxu0 0
    %231 = vmatpush2.bf16.msra.mxu0 0
    %232 = vmatprep.mubr.bf16.mxu0 0
    %233 = vmatmul.mubr.bf16.gmra.mxu0 %v128
    %v234 = vpop.f32.mrf.mxu0
    %v235 = vadd.f32 %v150, %v234
    %v236 = vpop.f32.mrf.mxu0
    %v237 = vpop.f32.mrf.mxu0
    %v238 = vpop.f32.mrf.mxu0
    %239 = vdwg.mxu0
    %v240 = vmax.f32 %v235, 0.0
    %v241 = vpack.c.bf16 %v240, %v240
    %v242 = vld [vmem:[#allocation4] sm:$0xf]
    %v243 = vld [vmem:[#allocation4 + $0x4] sm:$0xf]
    %v244 = vld [vmem:[#allocation4 + $0x8] sm:$0xf]
    %v245 = vld [vmem:[#allocation4 + $0xc] sm:$0xf]
    %v246 = vld [vmem:[#allocation4 + $0x10] sm:$0xf]
    %v247 = vld [vmem:[#allocation4 + $0x14] sm:$0xf]
    %v248 = vld [vmem:[#allocation4 + $0x18] sm:$0xf]
    %v249 = vld [vmem:[#allocation4 + $0x1c] sm:$0xf]
    %v250 = vld [vmem:[#allocation4 + $0x20] sm:$0xf]
    %v251 = vld [vmem:[#allocation4 + $0x24] sm:$0xf]
    %v252 = vld [vmem:[#allocation4 + $0x28] sm:$0xf]
    %v253 = vld [vmem:[#allocation4 + $0x2c] sm:$0xf]
    %v254 = vld [vmem:[#allocation4 + $0x30] sm:$0xf]
    %v255 = vld [vmem:[#allocation4 + $0x34] sm:$0xf]
    %v256 = vld [vmem:[#allocation4 + $0x38] sm:$0xf]
    %v257 = vld [vmem:[#allocation4 + $0x3c] sm:$0xf]
    %v258 = vld [vmem:[%s4] sm:$0x1]
    %v260 = vlaneseq
    %v261 = vshrl.u32 %v260, 7
    %v262 = vsub.s32 0, %v261
    %v263 = vrot.slane %v258, %v262
    %v281 = vunpack.c.l.b16 %v242
    %v282 = vunpack.c.l.b16 %v243
    %v283 = vunpack.c.l.b16 %v244
    %v284 = vunpack.c.l.b16 %v245
    %v285 = vunpack.c.l.b16 %v246
    %v286 = vunpack.c.l.b16 %v247
    %v287 = vunpack.c.l.b16 %v248
    %v288 = vunpack.c.l.b16 %v249
    %v289 = vunpack.c.l.b16 %v250
    %v290 = vunpack.c.l.b16 %v251
    %v291 = vunpack.c.l.b16 %v252
    %v292 = vunpack.c.l.b16 %v253
    %v293 = vunpack.c.l.b16 %v254
    %v294 = vunpack.c.l.b16 %v255
    %v295 = vunpack.c.l.b16 %v256
    %v296 = vunpack.c.l.b16 %v257
    %v297 = vpack.c.b16 %v282, %v281
    %v298 = vpack.c.b16 %v284, %v283
    %v299 = vpack.c.b16 %v286, %v285
    %v300 = vpack.c.b16 %v288, %v287
    %v301 = vpack.c.b16 %v290, %v289
    %v302 = vpack.c.b16 %v292, %v291
    %v303 = vpack.c.b16 %v294, %v293
    %v304 = vpack.c.b16 %v296, %v295
    %313 = vmatprep.subr.bf16.mxu0 0
    %314 = vmatpush1.bf16.msra.mxu0 %v304
    %315 = vmatprep.subr.bf16.mxu0 0
    %316 = vmatpush1.bf16.msra.mxu0 %v303
    %317 = vmatprep.subr.bf16.mxu0 0
    %318 = vmatpush1.bf16.msra.mxu0 %v302
    %319 = vmatprep.subr.bf16.mxu0 0
    %320 = vmatpush1.bf16.msra.mxu0 %v301
    %321 = vmatprep.subr.bf16.mxu0 0
    %322 = vmatpush1.bf16.msra.mxu0 %v300
    %323 = vmatprep.subr.bf16.mxu0 0
    %324 = vmatpush1.bf16.msra.mxu0 %v299
    %325 = vmatprep.subr.bf16.mxu0 0
    %326 = vmatpush1.bf16.msra.mxu0 %v298
    %327 = vmatprep.subr.bf16.mxu0 0
    %328 = vmatpush1.bf16.msra.mxu0 %v297
    %329 = vmatprep.subr.bf16.mxu0 0
    %330 = vmatpush2.bf16.msra.mxu0 0
    %331 = vmatprep.subr.bf16.mxu0 0
    %332 = vmatpush2.bf16.msra.mxu0 0
    %333 = vmatprep.subr.bf16.mxu0 0
    %334 = vmatpush2.bf16.msra.mxu0 0
    %335 = vmatprep.subr.bf16.mxu0 0
    %336 = vmatpush2.bf16.msra.mxu0 0
    %337 = vmatprep.subr.bf16.mxu0 0
    %338 = vmatpush2.bf16.msra.mxu0 0
    %339 = vmatprep.subr.bf16.mxu0 0
    %340 = vmatpush2.bf16.msra.mxu0 0
    %341 = vmatprep.subr.bf16.mxu0 0
    %342 = vmatpush2.bf16.msra.mxu0 0
    %343 = vmatprep.subr.bf16.mxu0 0
    %344 = vmatpush2.bf16.msra.mxu0 0
    %345 = vmatprep.mubr.bf16.mxu0 0
    %346 = vmatmul.mubr.bf16.gmra.mxu0 %v241
    %v347 = vpop.f32.mrf.mxu0
    %v348 = vadd.f32 %v263, %v347
    %v349 = vpop.f32.mrf.mxu0
    %v350 = vpop.f32.mrf.mxu0
    %v351 = vpop.f32.mrf.mxu0
    %352 = vdwg.mxu0
    %v353 = vmax.f32 %v348, 0.0
    %v354 = vpack.c.bf16 %v353, %v353
    %v355 = vld [vmem:[#allocation6] sm:$0xff]
    %v356 = vld [vmem:[#allocation6 + $0x8] sm:$0xff]
    %v357 = vld [vmem:[#allocation6 + $0x10] sm:$0xff]
    %v358 = vld [vmem:[#allocation6 + $0x18] sm:$0xff]
    %v359 = vld [vmem:[#allocation6 + $0x20] sm:$0xff]
    %v360 = vld [vmem:[#allocation6 + $0x28] sm:$0xff]
    %v361 = vld [vmem:[#allocation6 + $0x30] sm:$0xff]
    %v362 = vld [vmem:[#allocation6 + $0x38] sm:$0xff]
    %v363 = vld [vmem:[#allocation6 + $0x40] sm:$0xff]
    %v364 = vld [vmem:[#allocation6 + $0x48] sm:$0xff]
    %v365 = vld [vmem:[#allocation6 + $0x50] sm:$0xff]
    %v366 = vld [vmem:[#allocation6 + $0x58] sm:$0xff]
    %v367 = vld [vmem:[#allocation6 + $0x60] sm:$0xff]
    %v368 = vld [vmem:[#allocation6 + $0x68] sm:$0xff]
    %v369 = vld [vmem:[#allocation6 + $0x70] sm:$0xff]
    %v370 = vld [vmem:[#allocation6 + $0x78] sm:$0xff]
    %v371 = vld [vmem:[%s6] sm:$0x3]
    %v373 = vlaneseq
    %v374 = vshrl.u32 %v373, 7
    %v375 = vsub.s32 0, %v374
    %v376 = vrot.slane %v371, %v375
    %v377 = vlaneseq
    %v378 = vshrl.u32 %v377, 7
    %v379 = vsub.s32 1, %v378
    %v380 = vrot.slane %v371, %v379
    %v399 = vunpack.c.l.b16 %v355
    %v400 = vunpack.c.h.b16 %v355
    %v401 = vunpack.c.l.b16 %v356
    %v402 = vunpack.c.h.b16 %v356
    %v403 = vunpack.c.l.b16 %v357
    %v404 = vunpack.c.h.b16 %v357
    %v405 = vunpack.c.l.b16 %v358
    %v406 = vunpack.c.h.b16 %v358
    %v407 = vunpack.c.l.b16 %v359
    %v408 = vunpack.c.h.b16 %v359
    %v409 = vunpack.c.l.b16 %v360
    %v410 = vunpack.c.h.b16 %v360
    %v411 = vunpack.c.l.b16 %v361
    %v412 = vunpack.c.h.b16 %v361
    %v413 = vunpack.c.l.b16 %v362
    %v414 = vunpack.c.h.b16 %v362
    %v415 = vunpack.c.l.b16 %v363
    %v416 = vunpack.c.h.b16 %v363
    %v417 = vunpack.c.l.b16 %v364
    %v418 = vunpack.c.h.b16 %v364
    %v419 = vunpack.c.l.b16 %v365
    %v420 = vunpack.c.h.b16 %v365
    %v421 = vunpack.c.l.b16 %v366
    %v422 = vunpack.c.h.b16 %v366
    %v423 = vunpack.c.l.b16 %v367
    %v424 = vunpack.c.h.b16 %v367
    %v425 = vunpack.c.l.b16 %v368
    %v426 = vunpack.c.h.b16 %v368
    %v427 = vunpack.c.l.b16 %v369
    %v428 = vunpack.c.h.b16 %v369
    %v429 = vunpack.c.l.b16 %v370
    %v430 = vunpack.c.h.b16 %v370
    %v431 = vpack.c.b16 %v401, %v399
    %v432 = vpack.c.b16 %v402, %v400
    %v433 = vpack.c.b16 %v405, %v403
    %v434 = vpack.c.b16 %v406, %v404
    %v435 = vpack.c.b16 %v409, %v407
    %v436 = vpack.c.b16 %v410, %v408
    %v437 = vpack.c.b16 %v413, %v411
    %v438 = vpack.c.b16 %v414, %v412
    %v439 = vpack.c.b16 %v417, %v415
    %v440 = vpack.c.b16 %v418, %v416
    %v441 = vpack.c.b16 %v421, %v419
    %v442 = vpack.c.b16 %v422, %v420
    %v443 = vpack.c.b16 %v425, %v423
    %v444 = vpack.c.b16 %v426, %v424
    %v445 = vpack.c.b16 %v429, %v427
    %v446 = vpack.c.b16 %v430, %v428
    %463 = vmatprep.subr.bf16.mxu0 %v446
    %464 = vmatpush1.bf16.msra.mxu0 %v445
    %465 = vmatprep.subr.bf16.mxu0 %v444
    %466 = vmatpush1.bf16.msra.mxu0 %v443
    %467 = vmatprep.subr.bf16.mxu0 %v442
    %468 = vmatpush1.bf16.msra.mxu0 %v441
    %469 = vmatprep.subr.bf16.mxu0 %v440
    %470 = vmatpush1.bf16.msra.mxu0 %v439
    %471 = vmatprep.subr.bf16.mxu0 %v438
    %472 = vmatpush1.bf16.msra.mxu0 %v437
    %473 = vmatprep.subr.bf16.mxu0 %v436
    %474 = vmatpush1.bf16.msra.mxu0 %v435
    %475 = vmatprep.subr.bf16.mxu0 %v434
    %476 = vmatpush1.bf16.msra.mxu0 %v433
    %477 = vmatprep.subr.bf16.mxu0 %v432
    %478 = vmatpush1.bf16.msra.mxu0 %v431
    %479 = vmatprep.subr.bf16.mxu0 0
    %480 = vmatpush2.bf16.msra.mxu0 0
    %481 = vmatprep.subr.bf16.mxu0 0
    %482 = vmatpush2.bf16.msra.mxu0 0
    %483 = vmatprep.subr.bf16.mxu0 0
    %484 = vmatpush2.bf16.msra.mxu0 0
    %485 = vmatprep.subr.bf16.mxu0 0
    %486 = vmatpush2.bf16.msra.mxu0 0
    %487 = vmatprep.subr.bf16.mxu0 0
    %488 = vmatpush2.bf16.msra.mxu0 0
    %489 = vmatprep.subr.bf16.mxu0 0
    %490 = vmatpush2.bf16.msra.mxu0 0
    %491 = vmatprep.subr.bf16.mxu0 0
    %492 = vmatpush2.bf16.msra.mxu0 0
    %493 = vmatprep.subr.bf16.mxu0 0
    %494 = vmatpush2.bf16.msra.mxu0 0
    %495 = vmatprep.mubr.bf16.mxu0 0
    %496 = vmatmul.mubr.bf16.gmra.mxu0 %v354
    %v497 = vpop.f32.mrf.mxu0
    %v498 = vadd.f32 %v376, %v497
    %v499 = vpop.f32.mrf.mxu0
    %v500 = vadd.f32 %v380, %v499
    %v501 = vpop.f32.mrf.mxu0
    %v502 = vpop.f32.mrf.mxu0
    %503 = vdwg.mxu0
    %v504 = vmax.f32 %v498, 0.0
    %v505 = vmax.f32 %v500, 0.0
    %v506 = vpack.c.bf16 %v504, %v504
    %v507 = vpack.c.bf16 %v505, %v505
    %v508 = vld [vmem:[#allocation7] sm:$0xff]
    %v509 = vld [vmem:[#allocation7 + $0x8] sm:$0xff]
    %v510 = vld [vmem:[#allocation7 + $0x10] sm:$0xff]
    %v511 = vld [vmem:[#allocation7 + $0x18] sm:$0xff]
    %v512 = vld [vmem:[#allocation7 + $0x20] sm:$0xff]
    %v513 = vld [vmem:[#allocation7 + $0x28] sm:$0xff]
    %v514 = vld [vmem:[#allocation7 + $0x30] sm:$0xff]
    %v515 = vld [vmem:[#allocation7 + $0x38] sm:$0xff]
    %v516 = vld [vmem:[#allocation7 + $0x40] sm:$0xff]
    %v517 = vld [vmem:[#allocation7 + $0x48] sm:$0xff]
    %v518 = vld [vmem:[#allocation7 + $0x50] sm:$0xff]
    %v519 = vld [vmem:[#allocation7 + $0x58] sm:$0xff]
    %v520 = vld [vmem:[#allocation7 + $0x60] sm:$0xff]
    %v521 = vld [vmem:[#allocation7 + $0x68] sm:$0xff]
    %v522 = vld [vmem:[#allocation7 + $0x70] sm:$0xff]
    %v523 = vld [vmem:[#allocation7 + $0x78] sm:$0xff]
    %v524 = vld [vmem:[#allocation7 + $0x80] sm:$0xff]
    %v525 = vld [vmem:[#allocation7 + $0x88] sm:$0xff]
    %v526 = vld [vmem:[#allocation7 + $0x90] sm:$0xff]
    %v527 = vld [vmem:[#allocation7 + $0x98] sm:$0xff]
    %v528 = vld [vmem:[#allocation7 + $0xa0] sm:$0xff]
    %v529 = vld [vmem:[#allocation7 + $0xa8] sm:$0xff]
    %v530 = vld [vmem:[#allocation7 + $0xb0] sm:$0xff]
    %v531 = vld [vmem:[#allocation7 + $0xb8] sm:$0xff]
    %v532 = vld [vmem:[#allocation7 + $0xc0] sm:$0xff]
    %v533 = vld [vmem:[#allocation7 + $0xc8] sm:$0xff]
    %v534 = vld [vmem:[#allocation7 + $0xd0] sm:$0xff]
    %v535 = vld [vmem:[#allocation7 + $0xd8] sm:$0xff]
    %v536 = vld [vmem:[#allocation7 + $0xe0] sm:$0xff]
    %v537 = vld [vmem:[#allocation7 + $0xe8] sm:$0xff]
    %v538 = vld [vmem:[#allocation7 + $0xf0] sm:$0xff]
    %v539 = vld [vmem:[#allocation7 + $0xf8] sm:$0xff]
    %v540 = vld [vmem:[%s8] sm:$0x3]
    %v542 = vlaneseq
    %v543 = vshrl.u32 %v542, 7
    %v544 = vsub.s32 0, %v543
    %v545 = vrot.slane %v540, %v544
    %v546 = vlaneseq
    %v547 = vshrl.u32 %v546, 7
    %v548 = vsub.s32 1, %v547
    %v549 = vrot.slane %v540, %v548
    %v584 = vunpack.c.l.b16 %v508
    %v585 = vunpack.c.h.b16 %v508
    %v586 = vunpack.c.l.b16 %v509
    %v587 = vunpack.c.h.b16 %v509
    %v588 = vunpack.c.l.b16 %v510
    %v589 = vunpack.c.h.b16 %v510
    %v590 = vunpack.c.l.b16 %v511
    %v591 = vunpack.c.h.b16 %v511
    %v592 = vunpack.c.l.b16 %v512
    %v593 = vunpack.c.h.b16 %v512
    %v594 = vunpack.c.l.b16 %v513
    %v595 = vunpack.c.h.b16 %v513
    %v596 = vunpack.c.l.b16 %v514
    %v597 = vunpack.c.h.b16 %v514
    %v598 = vunpack.c.l.b16 %v515
    %v599 = vunpack.c.h.b16 %v515
    %v600 = vunpack.c.l.b16 %v516
    %v601 = vunpack.c.h.b16 %v516
    %v602 = vunpack.c.l.b16 %v517
    %v603 = vunpack.c.h.b16 %v517
    %v604 = vunpack.c.l.b16 %v518
    %v605 = vunpack.c.h.b16 %v518
    %v606 = vunpack.c.l.b16 %v519
    %v607 = vunpack.c.h.b16 %v519
    %v608 = vunpack.c.l.b16 %v520
    %v609 = vunpack.c.h.b16 %v520
    %v610 = vunpack.c.l.b16 %v521
    %v611 = vunpack.c.h.b16 %v521
    %v612 = vunpack.c.l.b16 %v522
    %v613 = vunpack.c.h.b16 %v522
    %v614 = vunpack.c.l.b16 %v523
    %v615 = vunpack.c.h.b16 %v523
    %v616 = vunpack.c.l.b16 %v524
    %v617 = vunpack.c.h.b16 %v524
    %v618 = vunpack.c.l.b16 %v525
    %v619 = vunpack.c.h.b16 %v525
    %v620 = vunpack.c.l.b16 %v526
    %v621 = vunpack.c.h.b16 %v526
    %v622 = vunpack.c.l.b16 %v527
    %v623 = vunpack.c.h.b16 %v527
    %v624 = vunpack.c.l.b16 %v528
    %v625 = vunpack.c.h.b16 %v528
    %v626 = vunpack.c.l.b16 %v529
    %v627 = vunpack.c.h.b16 %v529
    %v628 = vunpack.c.l.b16 %v530
    %v629 = vunpack.c.h.b16 %v530
    %v630 = vunpack.c.l.b16 %v531
    %v631 = vunpack.c.h.b16 %v531
    %v632 = vunpack.c.l.b16 %v532
    %v633 = vunpack.c.h.b16 %v532
    %v634 = vunpack.c.l.b16 %v533
    %v635 = vunpack.c.h.b16 %v533
    %v636 = vunpack.c.l.b16 %v534
    %v637 = vunpack.c.h.b16 %v534
    %v638 = vunpack.c.l.b16 %v535
    %v639 = vunpack.c.h.b16 %v535
    %v640 = vunpack.c.l.b16 %v536
    %v641 = vunpack.c.h.b16 %v536
    %v642 = vunpack.c.l.b16 %v537
    %v643 = vunpack.c.h.b16 %v537
    %v644 = vunpack.c.l.b16 %v538
    %v645 = vunpack.c.h.b16 %v538
    %v646 = vunpack.c.l.b16 %v539
    %v647 = vunpack.c.h.b16 %v539
    %v648 = vpack.c.b16 %v586, %v584
    %v649 = vpack.c.b16 %v587, %v585
    %v650 = vpack.c.b16 %v590, %v588
    %v651 = vpack.c.b16 %v591, %v589
    %v652 = vpack.c.b16 %v594, %v592
    %v653 = vpack.c.b16 %v595, %v593
    %v654 = vpack.c.b16 %v598, %v596
    %v655 = vpack.c.b16 %v599, %v597
    %v656 = vpack.c.b16 %v602, %v600
    %v657 = vpack.c.b16 %v603, %v601
    %v658 = vpack.c.b16 %v606, %v604
    %v659 = vpack.c.b16 %v607, %v605
    %v660 = vpack.c.b16 %v610, %v608
    %v661 = vpack.c.b16 %v611, %v609
    %v662 = vpack.c.b16 %v614, %v612
    %v663 = vpack.c.b16 %v615, %v613
    %v664 = vpack.c.b16 %v618, %v616
    %v665 = vpack.c.b16 %v619, %v617
    %v666 = vpack.c.b16 %v622, %v620
    %v667 = vpack.c.b16 %v623, %v621
    %v668 = vpack.c.b16 %v626, %v624
    %v669 = vpack.c.b16 %v627, %v625
    %v670 = vpack.c.b16 %v630, %v628
    %v671 = vpack.c.b16 %v631, %v629
    %v672 = vpack.c.b16 %v634, %v632
    %v673 = vpack.c.b16 %v635, %v633
    %v674 = vpack.c.b16 %v638, %v636
    %v675 = vpack.c.b16 %v639, %v637
    %v676 = vpack.c.b16 %v642, %v640
    %v677 = vpack.c.b16 %v643, %v641
    %v678 = vpack.c.b16 %v646, %v644
    %v679 = vpack.c.b16 %v647, %v645
    %712 = vmatprep.subr.bf16.mxu0 %v663
    %713 = vmatpush1.bf16.msra.mxu0 %v662
    %714 = vmatprep.subr.bf16.mxu0 %v661
    %715 = vmatpush1.bf16.msra.mxu0 %v660
    %716 = vmatprep.subr.bf16.mxu0 %v659
    %717 = vmatpush1.bf16.msra.mxu0 %v658
    %718 = vmatprep.subr.bf16.mxu0 %v657
    %719 = vmatpush1.bf16.msra.mxu0 %v656
    %720 = vmatprep.subr.bf16.mxu0 %v655
    %721 = vmatpush1.bf16.msra.mxu0 %v654
    %722 = vmatprep.subr.bf16.mxu0 %v653
    %723 = vmatpush1.bf16.msra.mxu0 %v652
    %724 = vmatprep.subr.bf16.mxu0 %v651
    %725 = vmatpush1.bf16.msra.mxu0 %v650
    %726 = vmatprep.subr.bf16.mxu0 %v649
    %727 = vmatpush1.bf16.msra.mxu0 %v648
    %728 = vmatprep.subr.bf16.mxu0 %v679
    %729 = vmatpush2.bf16.msra.mxu0 %v678
    %730 = vmatprep.subr.bf16.mxu0 %v677
    %731 = vmatpush2.bf16.msra.mxu0 %v676
    %732 = vmatprep.subr.bf16.mxu0 %v675
    %733 = vmatpush2.bf16.msra.mxu0 %v674
    %734 = vmatprep.subr.bf16.mxu0 %v673
    %735 = vmatpush2.bf16.msra.mxu0 %v672
    %736 = vmatprep.subr.bf16.mxu0 %v671
    %737 = vmatpush2.bf16.msra.mxu0 %v670
    %738 = vmatprep.subr.bf16.mxu0 %v669
    %739 = vmatpush2.bf16.msra.mxu0 %v668
    %740 = vmatprep.subr.bf16.mxu0 %v667
    %741 = vmatpush2.bf16.msra.mxu0 %v666
    %742 = vmatprep.subr.bf16.mxu0 %v665
    %743 = vmatpush2.bf16.msra.mxu0 %v664
    %744 = vmatprep.mubr.bf16.mxu0 %v507
    %745 = vmatmul.mubr.bf16.gmra.mxu0 %v506
    %v746 = vpop.f32.mrf.mxu0
    %v747 = vadd.f32 %v545, %v746
    %v748 = vpop.f32.mrf.mxu0
    %v749 = vadd.f32 %v549, %v748
    %v750 = vpop.f32.mrf.mxu0
    %v751 = vpop.f32.mrf.mxu0
    %752 = vdwg.mxu0
    %v753 = vmax.f32 %v747, 0.0
    %v754 = vmax.f32 %v749, 0.0
    %v755 = vpack.c.bf16 %v753, %v753
    %v756 = vpack.c.bf16 %v754, %v754
    %v757 = vld [vmem:[#allocation9] sm:$0xf]
    %v758 = vld [vmem:[#allocation9 + $0x4] sm:$0xf]
    %v759 = vld [vmem:[#allocation9 + $0x8] sm:$0xf]
    %v760 = vld [vmem:[#allocation9 + $0xc] sm:$0xf]
    %v761 = vld [vmem:[#allocation9 + $0x10] sm:$0xf]
    %v762 = vld [vmem:[#allocation9 + $0x14] sm:$0xf]
    %v763 = vld [vmem:[#allocation9 + $0x18] sm:$0xf]
    %v764 = vld [vmem:[#allocation9 + $0x1c] sm:$0xf]
    %v765 = vld [vmem:[#allocation9 + $0x20] sm:$0xf]
    %v766 = vld [vmem:[#allocation9 + $0x24] sm:$0xf]
    %v767 = vld [vmem:[#allocation9 + $0x28] sm:$0xf]
    %v768 = vld [vmem:[#allocation9 + $0x2c] sm:$0xf]
    %v769 = vld [vmem:[#allocation9 + $0x30] sm:$0xf]
    %v770 = vld [vmem:[#allocation9 + $0x34] sm:$0xf]
    %v771 = vld [vmem:[#allocation9 + $0x38] sm:$0xf]
    %v772 = vld [vmem:[#allocation9 + $0x3c] sm:$0xf]
    %v773 = vld [vmem:[#allocation9 + $0x40] sm:$0xf]
    %v774 = vld [vmem:[#allocation9 + $0x44] sm:$0xf]
    %v775 = vld [vmem:[#allocation9 + $0x48] sm:$0xf]
    %v776 = vld [vmem:[#allocation9 + $0x4c] sm:$0xf]
    %v777 = vld [vmem:[#allocation9 + $0x50] sm:$0xf]
    %v778 = vld [vmem:[#allocation9 + $0x54] sm:$0xf]
    %v779 = vld [vmem:[#allocation9 + $0x58] sm:$0xf]
    %v780 = vld [vmem:[#allocation9 + $0x5c] sm:$0xf]
    %v781 = vld [vmem:[#allocation9 + $0x60] sm:$0xf]
    %v782 = vld [vmem:[#allocation9 + $0x64] sm:$0xf]
    %v783 = vld [vmem:[#allocation9 + $0x68] sm:$0xf]
    %v784 = vld [vmem:[#allocation9 + $0x6c] sm:$0xf]
    %v785 = vld [vmem:[#allocation9 + $0x70] sm:$0xf]
    %v786 = vld [vmem:[#allocation9 + $0x74] sm:$0xf]
    %v787 = vld [vmem:[#allocation9 + $0x78] sm:$0xf]
    %v788 = vld [vmem:[#allocation9 + $0x7c] sm:$0xf]
    %v789 = vld [vmem:[%s10] sm:$0x1]
    %v791 = vlaneseq
    %v792 = vshrl.u32 %v791, 7
    %v793 = vsub.s32 0, %v792
    %v794 = vrot.slane %v789, %v793
    %v828 = vunpack.c.l.b16 %v757
    %v829 = vunpack.c.l.b16 %v758
    %v830 = vunpack.c.l.b16 %v759
    %v831 = vunpack.c.l.b16 %v760
    %v832 = vunpack.c.l.b16 %v761
    %v833 = vunpack.c.l.b16 %v762
    %v834 = vunpack.c.l.b16 %v763
    %v835 = vunpack.c.l.b16 %v764
    %v836 = vunpack.c.l.b16 %v765
    %v837 = vunpack.c.l.b16 %v766
    %v838 = vunpack.c.l.b16 %v767
    %v839 = vunpack.c.l.b16 %v768
    %v840 = vunpack.c.l.b16 %v769
    %v841 = vunpack.c.l.b16 %v770
    %v842 = vunpack.c.l.b16 %v771
    %v843 = vunpack.c.l.b16 %v772
    %v844 = vunpack.c.l.b16 %v773
    %v845 = vunpack.c.l.b16 %v774
    %v846 = vunpack.c.l.b16 %v775
    %v847 = vunpack.c.l.b16 %v776
    %v848 = vunpack.c.l.b16 %v777
    %v849 = vunpack.c.l.b16 %v778
    %v850 = vunpack.c.l.b16 %v779
    %v851 = vunpack.c.l.b16 %v780
    %v852 = vunpack.c.l.b16 %v781
    %v853 = vunpack.c.l.b16 %v782
    %v854 = vunpack.c.l.b16 %v783
    %v855 = vunpack.c.l.b16 %v784
    %v856 = vunpack.c.l.b16 %v785
    %v857 = vunpack.c.l.b16 %v786
    %v858 = vunpack.c.l.b16 %v787
    %v859 = vunpack.c.l.b16 %v788
    %v860 = vpack.c.b16 %v829, %v828
    %v861 = vpack.c.b16 %v831, %v830
    %v862 = vpack.c.b16 %v833, %v832
    %v863 = vpack.c.b16 %v835, %v834
    %v864 = vpack.c.b16 %v837, %v836
    %v865 = vpack.c.b16 %v839, %v838
    %v866 = vpack.c.b16 %v841, %v840
    %v867 = vpack.c.b16 %v843, %v842
    %v868 = vpack.c.b16 %v845, %v844
    %v869 = vpack.c.b16 %v847, %v846
    %v870 = vpack.c.b16 %v849, %v848
    %v871 = vpack.c.b16 %v851, %v850
    %v872 = vpack.c.b16 %v853, %v852
    %v873 = vpack.c.b16 %v855, %v854
    %v874 = vpack.c.b16 %v857, %v856
    %v875 = vpack.c.b16 %v859, %v858
    %892 = vmatprep.subr.bf16.mxu0 0
    %893 = vmatpush1.bf16.msra.mxu0 %v867
    %894 = vmatprep.subr.bf16.mxu0 0
    %895 = vmatpush1.bf16.msra.mxu0 %v866
    %896 = vmatprep.subr.bf16.mxu0 0
    %897 = vmatpush1.bf16.msra.mxu0 %v865
    %898 = vmatprep.subr.bf16.mxu0 0
    %899 = vmatpush1.bf16.msra.mxu0 %v864
    %900 = vmatprep.subr.bf16.mxu0 0
    %901 = vmatpush1.bf16.msra.mxu0 %v863
    %902 = vmatprep.subr.bf16.mxu0 0
    %903 = vmatpush1.bf16.msra.mxu0 %v862
    %904 = vmatprep.subr.bf16.mxu0 0
    %905 = vmatpush1.bf16.msra.mxu0 %v861
    %906 = vmatprep.subr.bf16.mxu0 0
    %907 = vmatpush1.bf16.msra.mxu0 %v860
    %908 = vmatprep.subr.bf16.mxu0 0
    %909 = vmatpush2.bf16.msra.mxu0 %v875
    %910 = vmatprep.subr.bf16.mxu0 0
    %911 = vmatpush2.bf16.msra.mxu0 %v874
    %912 = vmatprep.subr.bf16.mxu0 0
    %913 = vmatpush2.bf16.msra.mxu0 %v873
    %914 = vmatprep.subr.bf16.mxu0 0
    %915 = vmatpush2.bf16.msra.mxu0 %v872
    %916 = vmatprep.subr.bf16.mxu0 0
    %917 = vmatpush2.bf16.msra.mxu0 %v871
    %918 = vmatprep.subr.bf16.mxu0 0
    %919 = vmatpush2.bf16.msra.mxu0 %v870
    %920 = vmatprep.subr.bf16.mxu0 0
    %921 = vmatpush2.bf16.msra.mxu0 %v869
    %922 = vmatprep.subr.bf16.mxu0 0
    %923 = vmatpush2.bf16.msra.mxu0 %v868
    %924 = vmatprep.mubr.bf16.mxu0 %v756
    %925 = vmatmul.mubr.bf16.gmra.mxu0 %v755
    %v926 = vpop.f32.mrf.mxu0
    %v927 = vadd.f32 %v794, %v926
    %v928 = vpop.f32.mrf.mxu0
    %v929 = vpop.f32.mrf.mxu0
    %v930 = vpop.f32.mrf.mxu0
    %931 = vdwg.mxu0
    %v932 = vmax.f32 %v927, 0.0
    %v933 = vpack.c.bf16 %v932, %v932
    %v934 = vld [vmem:[#allocation10] sm:$0xf]
    %v935 = vld [vmem:[#allocation10 + $0x4] sm:$0xf]
    %v936 = vld [vmem:[#allocation10 + $0x8] sm:$0xf]
    %v937 = vld [vmem:[#allocation10 + $0xc] sm:$0xf]
    %v938 = vld [vmem:[#allocation10 + $0x10] sm:$0xf]
    %v939 = vld [vmem:[#allocation10 + $0x14] sm:$0xf]
    %v940 = vld [vmem:[#allocation10 + $0x18] sm:$0xf]
    %v941 = vld [vmem:[#allocation10 + $0x1c] sm:$0xf]
    %v942 = vld [vmem:[#allocation10 + $0x20] sm:$0xf]
    %v943 = vld [vmem:[#allocation10 + $0x24] sm:$0xf]
    %v944 = vld [vmem:[#allocation10 + $0x28] sm:$0xf]
    %v945 = vld [vmem:[#allocation10 + $0x2c] sm:$0xf]
    %v946 = vld [vmem:[#allocation10 + $0x30] sm:$0xf]
    %v947 = vld [vmem:[#allocation10 + $0x34] sm:$0xf]
    %v948 = vld [vmem:[#allocation10 + $0x38] sm:$0xf]
    %v949 = vld [vmem:[#allocation10 + $0x3c] sm:$0xf]
    %v950 = vld [vmem:[%s12] sm:$0x1]
    %v952 = vlaneseq
    %v953 = vshrl.u32 %v952, 7
    %v954 = vsub.s32 0, %v953
    %v955 = vrot.slane %v950, %v954
    %v973 = vunpack.c.l.b16 %v934
    %v974 = vunpack.c.l.b16 %v935
    %v975 = vunpack.c.l.b16 %v936
    %v976 = vunpack.c.l.b16 %v937
    %v977 = vunpack.c.l.b16 %v938
    %v978 = vunpack.c.l.b16 %v939
    %v979 = vunpack.c.l.b16 %v940
    %v980 = vunpack.c.l.b16 %v941
    %v981 = vunpack.c.l.b16 %v942
    %v982 = vunpack.c.l.b16 %v943
    %v983 = vunpack.c.l.b16 %v944
    %v984 = vunpack.c.l.b16 %v945
    %v985 = vunpack.c.l.b16 %v946
    %v986 = vunpack.c.l.b16 %v947
    %v987 = vunpack.c.l.b16 %v948
    %v988 = vunpack.c.l.b16 %v949
    %v989 = vpack.c.b16 %v974, %v973
    %v990 = vpack.c.b16 %v976, %v975
    %v991 = vpack.c.b16 %v978, %v977
    %v992 = vpack.c.b16 %v980, %v979
    %v993 = vpack.c.b16 %v982, %v981
    %v994 = vpack.c.b16 %v984, %v983
    %v995 = vpack.c.b16 %v986, %v985
    %v996 = vpack.c.b16 %v988, %v987
    %1005 = vmatprep.subr.bf16.mxu0 0
    %1006 = vmatpush1.bf16.msra.mxu0 %v996
    %1007 = vmatprep.subr.bf16.mxu0 0
    %1008 = vmatpush1.bf16.msra.mxu0 %v995
    %1009 = vmatprep.subr.bf16.mxu0 0
    %1010 = vmatpush1.bf16.msra.mxu0 %v994
    %1011 = vmatprep.subr.bf16.mxu0 0
    %1012 = vmatpush1.bf16.msra.mxu0 %v993
    %1013 = vmatprep.subr.bf16.mxu0 0
    %1014 = vmatpush1.bf16.msra.mxu0 %v992
    %1015 = vmatprep.subr.bf16.mxu0 0
    %1016 = vmatpush1.bf16.msra.mxu0 %v991
    %1017 = vmatprep.subr.bf16.mxu0 0
    %1018 = vmatpush1.bf16.msra.mxu0 %v990
    %1019 = vmatprep.subr.bf16.mxu0 0
    %1020 = vmatpush1.bf16.msra.mxu0 %v989
    %1021 = vmatprep.subr.bf16.mxu0 0
    %1022 = vmatpush2.bf16.msra.mxu0 0
    %1023 = vmatprep.subr.bf16.mxu0 0
    %1024 = vmatpush2.bf16.msra.mxu0 0
    %1025 = vmatprep.subr.bf16.mxu0 0
    %1026 = vmatpush2.bf16.msra.mxu0 0
    %1027 = vmatprep.subr.bf16.mxu0 0
    %1028 = vmatpush2.bf16.msra.mxu0 0
    %1029 = vmatprep.subr.bf16.mxu0 0
    %1030 = vmatpush2.bf16.msra.mxu0 0
    %1031 = vmatprep.subr.bf16.mxu0 0
    %1032 = vmatpush2.bf16.msra.mxu0 0
    %1033 = vmatprep.subr.bf16.mxu0 0
    %1034 = vmatpush2.bf16.msra.mxu0 0
    %1035 = vmatprep.subr.bf16.mxu0 0
    %1036 = vmatpush2.bf16.msra.mxu0 0
    %1037 = vmatprep.mubr.bf16.mxu0 0
    %1038 = vmatmul.mubr.bf16.gmra.mxu0 %v933
    %v1039 = vpop.f32.mrf.mxu0
    %v1040 = vadd.f32 %v955, %v1039
    %v1041 = vpop.f32.mrf.mxu0
    %v1042 = vpop.f32.mrf.mxu0
    %v1043 = vpop.f32.mrf.mxu0
    %1044 = vdwg.mxu0
    %1045 = vst [vmem:[%s13] sm:$0xff] %v1040
    // Predicated region
    $region78: #{policy_network_forward.1} parent=1 // pred_check
      _
    $region79: #{policy_network_forward.1} parent=1 // pred_check_branch
      %1047 = sbr.rel (0) target = $region81
    $region80: #{policy_network_forward.1} parent=1 // pred_region
      _
    $region81: #{policy_network_forward.1} parent=1 // pred_fallthru
      _
    // Predicated region
    $region82: #{policy_network_forward.1} parent=1 // pred_check
      _
    $region83: #{policy_network_forward.1} parent=1 // pred_check_branch
      %1049 = sbr.rel (0) target = $region85
    $region84: #{policy_network_forward.1} parent=1 // pred_region
      _
    $region85: #{policy_network_forward.1} parent=1 // pred_fallthru
      _
    %1050 = vsyncpa [#allocation3], 1
    %1051 = vsyncpa [#allocation5], 1
    %1052 = vsyncpa [#allocation8], 1
    %1053 = vsyncpa [#allocation11], 1

</llo_original>
